<compile_context>
chip_gen: v7x
topology: tpu7x:2x2x1
jax: 0.10.0
libtpu: 0.0.40
codegen_flags: <defaults>
</compile_context>

<pallas_src>
import jax
import jax.numpy as jnp
from jax.experimental import pallas as pl
from jax.experimental.pallas import tpu as pltpu

HID = 3        # hidden width of the tiny MLP
LANES = 128    # TPU lane width
SUBLANES = 8   # f32 sublane count


def _mlp_kernel(params_ref, x_ref, o_ref):
    # params_ref (SMEM, shape (22,) f32), flat layout:
    #   [0:3]   w1   (Linear(1,3) weight, per output channel)
    #   [3:6]   b1
    #   [6:15]  w2   row-major (3,3): w2[k, j] = params[6 + 3*k + j]
    #   [15:18] b2
    #   [18:21] w3   (Linear(3,1) weight)
    #   [21]    b3
    # x_ref / o_ref: (block_rows, 128) f32 — batch elements, lane-dense.

    # Hoist every SMEM scalar read once per grid step (JAX does not CSE the
    # implicit broadcast, so re-indexing inside the loops would re-splat).
    w1 = [params_ref[j] for j in range(HID)]
    b1 = [params_ref[HID + j] for j in range(HID)]
    w2 = [[params_ref[2 * HID + HID * k + j] for j in range(HID)]
          for k in range(HID)]
    b2 = [params_ref[15 + j] for j in range(HID)]
    w3 = [params_ref[18 + j] for j in range(HID)]
    b3 = params_ref[21]

    x = x_ref[...]

    # Layer 1: 1 -> 3, ReLU. Three (rows,128) planes, scalar broadcasts.
    h1 = [jnp.maximum(x * w1[j] + b1[j], 0.0) for j in range(HID)]

    # Layers 2 + 3 fused: out = sum_j relu(sum_k h1[k]*w2[k][j] + b2[j]) * w3[j] + b3
    out = None
    for j in range(HID):
        z = h1[0] * w2[0][j]
        for k in range(1, HID):
            z = z + h1[k] * w2[k][j]
        z = jnp.maximum(z + b2[j], 0.0)
        contrib = z * w3[j]
        out = contrib if out is None else out + contrib
    o_ref[...] = out + b3


def _pack_params(params):
    return jnp.concatenate([
        params["w1"].reshape(-1), params["b1"].reshape(-1),
        params["w2"].reshape(-1), params["b2"].reshape(-1),
        params["w3"].reshape(-1), params["b3"].reshape(-1),
    ]).astype(jnp.float32)


def ls_model_forward(x, params, *, max_block_rows=2048):
    """x: (N, 1) float32. params: dict of 2-D float32 weight/bias arrays."""
    n = x.shape[0]
    assert x.ndim == 2 and x.shape[1] == 1, "expected (N, 1) input"

    flat_params = _pack_params(params)            # (22,) f32 -> SMEM

    # Lane-dense layout: spread the batch over (rows, 128); rows rounded up
    # only to a sublane multiple (8), i.e. padding of at most 1023 elements.
    rows = pl.cdiv(max(n, 1), LANES)
    rows = -(-rows // SUBLANES) * SUBLANES
    n_pad = rows * LANES

    # Block choice: as large as allowed, but give the grid >=2 steps when
    # possible so v7x can shard the "parallel" axis across its 2 TensorCores.
    if rows >= 2 * SUBLANES:
        half = -(-(rows // 2) // SUBLANES) * SUBLANES
        block_rows = min(max_block_rows, half)
    else:
        block_rows = min(max_block_rows, rows)
    block_rows = max(SUBLANES, block_rows)
    grid = (pl.cdiv(rows, block_rows),)

    xf = x.reshape(-1).astype(jnp.float32)
    if n_pad > n:                                  # skip the HBM pass when aligned
        xf = jnp.pad(xf, (0, n_pad - n))
    x2 = xf.reshape(rows, LANES)

    out2 = pl.pallas_call(
        _mlp_kernel,
        out_shape=jax.ShapeDtypeStruct((rows, LANES), jnp.float32),
        grid_spec=pltpu.PrefetchScalarGridSpec(
            num_scalar_prefetch=1,
            grid=grid,
            in_specs=[pl.BlockSpec((block_rows, LANES), lambda i, p: (i, 0))],
            out_specs=pl.BlockSpec((block_rows, LANES), lambda i, p: (i, 0)),
        ),
        compiler_params=pltpu.CompilerParams(
            dimension_semantics=("parallel",),
            vmem_limit_bytes=32 << 20,             # explicit for v5e's 16 MiB default
        ),
        cost_estimate=pl.CostEstimate(
            flops=36 * n_pad, transcendentals=0, bytes_accessed=8 * n_pad),
    )(flat_params, x2)

    # TODO(synk): for large N, let the consumer keep the padded (rows,128)
    # layout instead of this slice to avoid an extra HBM pass.
    flat = out2.reshape(-1)
    if n_pad > n:
        flat = flat[:n]
    return flat.reshape(n, 1)


def init_params(key):
    """Deterministic init mimicking torch.nn.Linear (uniform +-1/sqrt(fan_in))."""
    ks = jax.random.split(key, 6)

    def lin(kw, kb, fan_in, fan_out):
        bound = 1.0 / jnp.sqrt(jnp.float32(fan_in))
        w = jax.random.uniform(kw, (fan_in, fan_out), jnp.float32, -bound, bound)
        b = jax.random.uniform(kb, (1, fan_out), jnp.float32, -bound, bound)
        return w, b

    w1, b1 = lin(ks[0], ks[1], 1, HID)
    w2, b2 = lin(ks[2], ks[3], HID, HID)
    w3, b3 = lin(ks[4], ks[5], HID, 1)
    return {"w1": w1, "b1": b1, "w2": w2, "b2": b2, "w3": w3, "b3": b3}


def _reference(x, p):
    h1 = jnp.maximum(x @ p["w1"] + p["b1"], 0.0)
    h2 = jnp.maximum(h1 @ p["w2"] + p["b2"], 0.0)
    return h2 @ p["w3"] + p["b3"]


if __name__ == "__main__":
    key = jax.random.PRNGKey(0)
    k_params, k_x = jax.random.split(key)
    params = init_params(k_params)

    batch = 8
    x = jax.random.normal(k_x, (batch, 1), dtype=jnp.float32)

    out = ls_model_forward(x, params)
    out = jax.block_until_ready(out)

    ref = _reference(x, params)
    assert out.shape == (batch, 1)
    assert jnp.allclose(out, ref, atol=1e-5, rtol=1e-5)

    # Also exercise a larger, non-aligned batch with a multi-step grid
    # (partial last block + "parallel" axis sharding path).
    big = 3000
    xb = jax.random.normal(jax.random.PRNGKey(1), (big, 1), dtype=jnp.float32)
    outb = jax.block_until_ready(ls_model_forward(xb, params))
    refb = _reference(xb, params)
    assert outb.shape == (big, 1)
    assert jnp.allclose(outb, refb, atol=1e-5, rtol=1e-5)

    print("KERNEL_OK")
</pallas_src>

<mosaic_0001>
module attributes {stable_mosaic.version = 11 : i64} {
  func.func @_mlp_kernel(%arg0: i32, %arg1: memref<22xf32, #tpu.memory_space<smem>>, %arg2: memref<8x128xf32, #tpu.memory_space<vmem>>, %arg3: memref<8x128xf32, #tpu.memory_space<vmem>>) attributes {dimension_semantics = [#tpu.dimension_semantics<parallel>], iteration_bounds = array<i64: 1>, scalar_prefetch = 1 : i64, scratch_operands = 0 : i64, tpu.core_type = #tpu.core_type<tc>, window_params = [{transform_indices = @transform_0, window_bounds = array<i64: 8, 128>}, {transform_indices = @transform_1, window_bounds = array<i64: 8, 128>}]} {
    %c0 = arith.constant 0 : index
    %0 = memref.load %arg1[%c0] : memref<22xf32, #tpu.memory_space<smem>>
    %c1 = arith.constant 1 : index
    %1 = memref.load %arg1[%c1] : memref<22xf32, #tpu.memory_space<smem>>
    %c2 = arith.constant 2 : index
    %2 = memref.load %arg1[%c2] : memref<22xf32, #tpu.memory_space<smem>>
    %c3 = arith.constant 3 : index
    %3 = memref.load %arg1[%c3] : memref<22xf32, #tpu.memory_space<smem>>
    %c4 = arith.constant 4 : index
    %4 = memref.load %arg1[%c4] : memref<22xf32, #tpu.memory_space<smem>>
    %c5 = arith.constant 5 : index
    %5 = memref.load %arg1[%c5] : memref<22xf32, #tpu.memory_space<smem>>
    %c6 = arith.constant 6 : index
    %6 = memref.load %arg1[%c6] : memref<22xf32, #tpu.memory_space<smem>>
    %c7 = arith.constant 7 : index
    %7 = memref.load %arg1[%c7] : memref<22xf32, #tpu.memory_space<smem>>
    %c8 = arith.constant 8 : index
    %8 = memref.load %arg1[%c8] : memref<22xf32, #tpu.memory_space<smem>>
    %c9 = arith.constant 9 : index
    %9 = memref.load %arg1[%c9] : memref<22xf32, #tpu.memory_space<smem>>
    %c10 = arith.constant 10 : index
    %10 = memref.load %arg1[%c10] : memref<22xf32, #tpu.memory_space<smem>>
    %c11 = arith.constant 11 : index
    %11 = memref.load %arg1[%c11] : memref<22xf32, #tpu.memory_space<smem>>
    %c12 = arith.constant 12 : index
    %12 = memref.load %arg1[%c12] : memref<22xf32, #tpu.memory_space<smem>>
    %c13 = arith.constant 13 : index
    %13 = memref.load %arg1[%c13] : memref<22xf32, #tpu.memory_space<smem>>
    %c14 = arith.constant 14 : index
    %14 = memref.load %arg1[%c14] : memref<22xf32, #tpu.memory_space<smem>>
    %c15 = arith.constant 15 : index
    %15 = memref.load %arg1[%c15] : memref<22xf32, #tpu.memory_space<smem>>
    %c16 = arith.constant 16 : index
    %16 = memref.load %arg1[%c16] : memref<22xf32, #tpu.memory_space<smem>>
    %c17 = arith.constant 17 : index
    %17 = memref.load %arg1[%c17] : memref<22xf32, #tpu.memory_space<smem>>
    %c18 = arith.constant 18 : index
    %18 = memref.load %arg1[%c18] : memref<22xf32, #tpu.memory_space<smem>>
    %c19 = arith.constant 19 : index
    %19 = memref.load %arg1[%c19] : memref<22xf32, #tpu.memory_space<smem>>
    %c20 = arith.constant 20 : index
    %20 = memref.load %arg1[%c20] : memref<22xf32, #tpu.memory_space<smem>>
    %c21 = arith.constant 21 : index
    %21 = memref.load %arg1[%c21] : memref<22xf32, #tpu.memory_space<smem>>
    %c0_0 = arith.constant 0 : index
    %c0_1 = arith.constant 0 : index
    %22 = vector.load %arg2[%c0_0, %c0_1] : memref<8x128xf32, #tpu.memory_space<vmem>>, vector<8x128xf32>
    %23 = vector.broadcast %0 : f32 to vector<8x128xf32>
    %24 = arith.mulf %22, %23 : vector<8x128xf32>
    %25 = vector.broadcast %3 : f32 to vector<8x128xf32>
    %26 = arith.addf %24, %25 : vector<8x128xf32>
    %cst = arith.constant 0.000000e+00 : f32
    %27 = vector.broadcast %cst : f32 to vector<8x128xf32>
    %28 = arith.maximumf %26, %27 : vector<8x128xf32>
    %29 = vector.broadcast %1 : f32 to vector<8x128xf32>
    %30 = arith.mulf %22, %29 : vector<8x128xf32>
    %31 = vector.broadcast %4 : f32 to vector<8x128xf32>
    %32 = arith.addf %30, %31 : vector<8x128xf32>
    %cst_2 = arith.constant 0.000000e+00 : f32
    %33 = vector.broadcast %cst_2 : f32 to vector<8x128xf32>
    %34 = arith.maximumf %32, %33 : vector<8x128xf32>
    %35 = vector.broadcast %2 : f32 to vector<8x128xf32>
    %36 = arith.mulf %22, %35 : vector<8x128xf32>
    %37 = vector.broadcast %5 : f32 to vector<8x128xf32>
    %38 = arith.addf %36, %37 : vector<8x128xf32>
    %cst_3 = arith.constant 0.000000e+00 : f32
    %39 = vector.broadcast %cst_3 : f32 to vector<8x128xf32>
    %40 = arith.maximumf %38, %39 : vector<8x128xf32>
    %41 = vector.broadcast %6 : f32 to vector<8x128xf32>
    %42 = arith.mulf %28, %41 : vector<8x128xf32>
    %43 = vector.broadcast %9 : f32 to vector<8x128xf32>
    %44 = arith.mulf %34, %43 : vector<8x128xf32>
    %45 = arith.addf %42, %44 : vector<8x128xf32>
    %46 = vector.broadcast %12 : f32 to vector<8x128xf32>
    %47 = arith.mulf %40, %46 : vector<8x128xf32>
    %48 = arith.addf %45, %47 : vector<8x128xf32>
    %49 = vector.broadcast %15 : f32 to vector<8x128xf32>
    %50 = arith.addf %48, %49 : vector<8x128xf32>
    %cst_4 = arith.constant 0.000000e+00 : f32
    %51 = vector.broadcast %cst_4 : f32 to vector<8x128xf32>
    %52 = arith.maximumf %50, %51 : vector<8x128xf32>
    %53 = vector.broadcast %18 : f32 to vector<8x128xf32>
    %54 = arith.mulf %52, %53 : vector<8x128xf32>
    %55 = vector.broadcast %7 : f32 to vector<8x128xf32>
    %56 = arith.mulf %28, %55 : vector<8x128xf32>
    %57 = vector.broadcast %10 : f32 to vector<8x128xf32>
    %58 = arith.mulf %34, %57 : vector<8x128xf32>
    %59 = arith.addf %56, %58 : vector<8x128xf32>
    %60 = vector.broadcast %13 : f32 to vector<8x128xf32>
    %61 = arith.mulf %40, %60 : vector<8x128xf32>
    %62 = arith.addf %59, %61 : vector<8x128xf32>
    %63 = vector.broadcast %16 : f32 to vector<8x128xf32>
    %64 = arith.addf %62, %63 : vector<8x128xf32>
    %cst_5 = arith.constant 0.000000e+00 : f32
    %65 = vector.broadcast %cst_5 : f32 to vector<8x128xf32>
    %66 = arith.maximumf %64, %65 : vector<8x128xf32>
    %67 = vector.broadcast %19 : f32 to vector<8x128xf32>
    %68 = arith.mulf %66, %67 : vector<8x128xf32>
    %69 = arith.addf %54, %68 : vector<8x128xf32>
    %70 = vector.broadcast %8 : f32 to vector<8x128xf32>
    %71 = arith.mulf %28, %70 : vector<8x128xf32>
    %72 = vector.broadcast %11 : f32 to vector<8x128xf32>
    %73 = arith.mulf %34, %72 : vector<8x128xf32>
    %74 = arith.addf %71, %73 : vector<8x128xf32>
    %75 = vector.broadcast %14 : f32 to vector<8x128xf32>
    %76 = arith.mulf %40, %75 : vector<8x128xf32>
    %77 = arith.addf %74, %76 : vector<8x128xf32>
    %78 = vector.broadcast %17 : f32 to vector<8x128xf32>
    %79 = arith.addf %77, %78 : vector<8x128xf32>
    %cst_6 = arith.constant 0.000000e+00 : f32
    %80 = vector.broadcast %cst_6 : f32 to vector<8x128xf32>
    %81 = arith.maximumf %79, %80 : vector<8x128xf32>
    %82 = vector.broadcast %20 : f32 to vector<8x128xf32>
    %83 = arith.mulf %81, %82 : vector<8x128xf32>
    %84 = arith.addf %69, %83 : vector<8x128xf32>
    %85 = vector.broadcast %21 : f32 to vector<8x128xf32>
    %86 = arith.addf %84, %85 : vector<8x128xf32>
    %c0_7 = arith.constant 0 : index
    %c0_8 = arith.constant 0 : index
    %87 = vector.load %arg3[%c0_7, %c0_8] : memref<8x128xf32, #tpu.memory_space<vmem>>, vector<8x128xf32>
    tpu.vector_store %arg3[%c0_7, %c0_8], %86 {strides = array<i32>} : memref<8x128xf32, #tpu.memory_space<vmem>>, vector<8x128xf32>,
    return
  }
  func.func @transform_0(%arg0: i32, %arg1: memref<22xf32, #tpu.memory_space<smem>>) -> (i32, i32) {
    %c0_i32 = arith.constant 0 : i32
    %c0_i32_0 = arith.constant 0 : i32
    return %arg0, %c0_i32 : i32, i32
  }
  func.func @transform_1(%arg0: i32, %arg1: memref<22xf32, #tpu.memory_space<smem>>) -> (i32, i32) {
    %c0_i32 = arith.constant 0 : i32
    %c0_i32_0 = arith.constant 0 : i32
    return %arg0, %c0_i32 : i32, i32
  }
}

</mosaic_0001>

<llo_original>
// kernel: tpu_custom_call.1
$region0: #{tpu_custom_call.1}
  #allocation0 [shape = 'u32[]', space=smem, size = 0x4, offset = 0x4, fixed_abs, tag = 'smem constant byte address 0x4 - core index']
  #allocation1 [shape = 'u32[144,128]{1,0:T(1,128)}', space=vmem, size = 0x12000, scoped, tag = 'internal scratch']
  #allocation2 [shape = 's32[1]{0}', space=sflag, size = 0x4, scoped, tag = 'scoped memory for tpu_custom_call.1']
  #allocation3 [shape = 'u8[512]{0}', space=smem, size = 0x200, scoped, tag = 'prefetched SMEM operand 0']
  %s0 = inlined_call_operand.hbm [shape: f32[22], index: 0, kind: input, shape index: {}]
  %s1 = inlined_call_operand.hbm [shape: f32[8,128], index: 1, kind: input, shape index: {}]
  %s2 = inlined_call_operand.hbm [shape: f32[8,128], index: 2, kind: output, shape index: {}]
  %s3 = sld [smem:[#allocation0]]
  $region18: #{tpu_custom_call.1} parent=0
    _
  %s5 = ssub.s32 1, %s3
  %s6 = scalar_select 0, %s5, %s3
  %8 = dma.hbm_to_smem %s0, 16, [#allocation3], [#allocation2]
  %9 = dma.done [#allocation2], 16
  %10 = sfence
  $region1: #{tpu_custom_call.1} parent=0
    #allocation4 [shape = 'u8[4096]{0}', space=vmem, size = 0x1000, scoped, tag = 'input window, operand 1, single buffered']
    #allocation5 [shape = 's32[1]{0}', space=sflag, size = 0x4, scoped, tag = 'scoped memory for tpu_custom_call.1']
    #allocation6 [shape = 's32[1]{0}', space=sflag, size = 0x4, scoped, tag = 'scoped memory for tpu_custom_call.1']
    #allocation7 [shape = 'u8[4096]{0}', space=vmem, size = 0x1000, scoped, tag = 'output window, operand 0, single buffered']
    %11 = vsyncpa [#allocation5], 0
    %12 = vsyncpa [#allocation6], 0
    // Predicated region
    $region2: #{tpu_custom_call.1} parent=1 // pred_check
      _
    $region3: #{tpu_custom_call.1} parent=1 // pred_check_branch
      %14 = sbr.rel (0) target = $region5
    $region4: #{tpu_custom_call.1} parent=1 // pred_region
      %s16 = ssub.s32 128, 128
      %17 = vsyncadd [#allocation5], %s16
      %s19 = sshll.u32 [#allocation4], 4
      %s20 = int_to_ptr.vmem [resolvable:$true] %s19
      %22 = dma.hbm_to_vmem [thread:$0]  %s1, 128, %s20, [#allocation5]
    $region5: #{tpu_custom_call.1} parent=1 // pred_fallthru
      _
    // Predicated region
    $region6: #{tpu_custom_call.1} parent=1 // pred_check
      _
    $region7: #{tpu_custom_call.1} parent=1 // pred_check_branch
      %24 = sbr.rel (0) target = $region9
    $region8: #{tpu_custom_call.1} parent=1 // pred_region
      %25 = dma.done [#allocation5], 128
    $region9: #{tpu_custom_call.1} parent=1 // pred_fallthru
      _
    %s26 = sld [smem:[#allocation3]]
    %s27 = sld [smem:[#allocation3 + $0x1]]
    %s28 = sld [smem:[#allocation3 + $0x2]]
    %s29 = sld [smem:[#allocation3 + $0x3]]
    %s30 = sld [smem:[#allocation3 + $0x4]]
    %s31 = sld [smem:[#allocation3 + $0x5]]
    %s32 = sld [smem:[#allocation3 + $0x6]]
    %s33 = sld [smem:[#allocation3 + $0x7]]
    %s34 = sld [smem:[#allocation3 + $0x8]]
    %s35 = sld [smem:[#allocation3 + $0x9]]
    %s36 = sld [smem:[#allocation3 + $0xa]]
    %s37 = sld [smem:[#allocation3 + $0xb]]
    %s38 = sld [smem:[#allocation3 + $0xc]]
    %s39 = sld [smem:[#allocation3 + $0xd]]
    %s40 = sld [smem:[#allocation3 + $0xe]]
    %s41 = sld [smem:[#allocation3 + $0xf]]
    %s42 = sld [smem:[#allocation3 + $0x10]]
    %s43 = sld [smem:[#allocation3 + $0x11]]
    %s44 = sld [smem:[#allocation3 + $0x12]]
    %s45 = sld [smem:[#allocation3 + $0x13]]
    %s46 = sld [smem:[#allocation3 + $0x14]]
    %s47 = sld [smem:[#allocation3 + $0x15]]
    %v48 = vld [vmem:[#allocation4] sm:$0xff]
    %v49 = vstv %s26
    %v50 = vmul.f32 %v48, %v49
    %v51 = vstv %s29
    %v52 = vadd.f32 %v50, %v51
    %v53 = vmax.f32 %v52, 0.0
    %v54 = vstv %s27
    %v55 = vmul.f32 %v48, %v54
    %v56 = vstv %s30
    %v57 = vadd.f32 %v55, %v56
    %v58 = vmax.f32 %v57, 0.0
    %v59 = vstv %s28
    %v60 = vmul.f32 %v48, %v59
    %v61 = vstv %s31
    %v62 = vadd.f32 %v60, %v61
    %v63 = vmax.f32 %v62, 0.0
    %v64 = vstv %s32
    %v65 = vmul.f32 %v53, %v64
    %v66 = vstv %s35
    %v67 = vmul.f32 %v58, %v66
    %v68 = vadd.f32 %v65, %v67
    %v69 = vstv %s38
    %v70 = vmul.f32 %v63, %v69
    %v71 = vadd.f32 %v68, %v70
    %v72 = vstv %s41
    %v73 = vadd.f32 %v71, %v72
    %v74 = vmax.f32 %v73, 0.0
    %v75 = vstv %s44
    %v76 = vmul.f32 %v74, %v75
    %v77 = vstv %s33
    %v78 = vmul.f32 %v53, %v77
    %v79 = vstv %s36
    %v80 = vmul.f32 %v58, %v79
    %v81 = vadd.f32 %v78, %v80
    %v82 = vstv %s39
    %v83 = vmul.f32 %v63, %v82
    %v84 = vadd.f32 %v81, %v83
    %v85 = vstv %s42
    %v86 = vadd.f32 %v84, %v85
    %v87 = vmax.f32 %v86, 0.0
    %v88 = vstv %s45
    %v89 = vmul.f32 %v87, %v88
    %v90 = vadd.f32 %v76, %v89
    %v91 = vstv %s34
    %v92 = vmul.f32 %v53, %v91
    %v93 = vstv %s37
    %v94 = vmul.f32 %v58, %v93
    %v95 = vadd.f32 %v92, %v94
    %v96 = vstv %s40
    %v97 = vmul.f32 %v63, %v96
    %v98 = vadd.f32 %v95, %v97
    %v99 = vstv %s43
    %v100 = vadd.f32 %v98, %v99
    %v101 = vmax.f32 %v100, 0.0
    %v102 = vstv %s46
    %v103 = vmul.f32 %v101, %v102
    %v104 = vadd.f32 %v90, %v103
    %v105 = vstv %s47
    %v106 = vadd.f32 %v104, %v105
    %107 = vst [vmem:[#allocation7] sm:$0xff] %v106
    // Predicated region
    $region10: #{tpu_custom_call.1} parent=1 // pred_check
      _
    $region11: #{tpu_custom_call.1} parent=1 // pred_check_branch
      %109 = sbr.rel (0) target = $region13
    $region12: #{tpu_custom_call.1} parent=1 // pred_region
      %s111 = ssub.s32 128, 128
      %112 = vsyncadd [#allocation6], %s111
      %s114 = sshll.u32 [#allocation7], 4
      %s115 = int_to_ptr.vmem [resolvable:$true] %s114
      %117 = dma.vmem_to_hbm [thread:$0]  %s115, 128, %s2, [#allocation6]
    $region13: #{tpu_custom_call.1} parent=1 // pred_fallthru
      _
    // Predicated region
    $region14: #{tpu_custom_call.1} parent=1 // pred_check
      _
    $region15: #{tpu_custom_call.1} parent=1 // pred_check_branch
      %119 = sbr.rel (0) target = $region17
    $region16: #{tpu_custom_call.1} parent=1 // pred_region
      %120 = dma.done [#allocation6], 128
    $region17: #{tpu_custom_call.1} parent=1 // pred_fallthru
      _
    %121 = vsyncpa [#allocation5], 1
    %122 = vsyncpa [#allocation6], 1

</llo_original>
